<compile_context>
chip_gen: v5e
topology: v5e:2x2
jax: 0.10.0
libtpu: 0.0.40
codegen_flags: <defaults>
</compile_context>

<pallas_src>
from functools import partial

import jax
import jax.numpy as jnp
from jax.experimental import pallas as pl
from jax.experimental.pallas import tpu as pltpu


def _round_up(x, m):
    return (x + m - 1) // m * m


def attn2_kernel(x_ref, w1_ref, b1_ref, w2_ref, b2_ref, o_ref, *, r):
    # x_ref : [TM, H]
    # w1_ref: [H, d_pad]      (pre-transposed, zero-padded d_a -> d_pad)
    # b1_ref: [1, d_pad]
    # w2_ref: [d_pad, r_pad]  (pre-transposed, zero-padded; pad rows are 0)
    # b2_ref: [1, r_pad]
    # o_ref : [TM, r]         narrow output block -> minimal HBM writeback
    x = x_ref[...]
    h = jnp.tanh(
        jnp.dot(x, w1_ref[...], preferred_element_type=jnp.float32) + b1_ref[...]
    )
    out = jnp.dot(h, w2_ref[...], preferred_element_type=jnp.float32) + b2_ref[...]
    # Store only the r real columns (a 10-lane masked store; the store slot is
    # nowhere near saturated and this cuts output HBM bytes ~12.8x).
    o_ref[...] = out[:, :r].astype(o_ref.dtype)


def prepare_params(w1, b1, w2, b2):
    """One-time param prep: transpose + zero-pad to lane-aligned shapes.

    w1: [d_a, H]  (linear_first.weight)   b1: [d_a]
    w2: [r, d_a]  (linear_second.weight)  b2: [r]
    Returns padded (w1_t, b1_p, w2_t, b2_p) plus the true output width r.
    """
    d_a, H = w1.shape
    r = w2.shape[0]
    d_pad = _round_up(d_a, 128)
    r_pad = _round_up(r, 128)

    w1_t = jnp.zeros((H, d_pad), jnp.float32).at[:, :d_a].set(w1.T)
    b1_p = jnp.zeros((1, d_pad), jnp.float32).at[:, :d_a].set(b1)
    w2_t = jnp.zeros((d_pad, r_pad), jnp.float32).at[:d_a, :r].set(w2.T)
    b2_p = jnp.zeros((1, r_pad), jnp.float32).at[:, :r].set(b2)
    return w1_t, b1_p, w2_t, b2_p, r


@partial(jax.jit, static_argnames=("r",))
def attn2_forward(enc, w1_t, b1_p, w2_t, b2_p, *, r):
    """enc: [B, S, H] float32. Returns [B, S, r] float32."""
    B, S, H = enc.shape
    d_pad = w1_t.shape[1]
    r_pad = w2_t.shape[1]

    M = B * S
    # Row-tile: big enough to amortize per-grid-step overhead, small enough
    # that there are >= 4 tiles once M is non-trivial (v7x megacore sharding).
    TM = min(2048, _round_up(pl.cdiv(M, 4), 8))
    grid = (pl.cdiv(M, TM),)

    x2d = enc.reshape(M, H)  # contiguous reshape; fuses into the call

    # Honest (unpadded-M, narrow-output) advisory cost for XLA's scheduler.
    cost = pl.CostEstimate(
        flops=2 * M * (H * d_pad + d_pad * r_pad),
        transcendentals=M * d_pad,
        bytes_accessed=4
        * (M * H + H * d_pad + d_pad + d_pad * r_pad + r_pad + M * r),
    )

    out2d = pl.pallas_call(
        partial(attn2_kernel, r=r),
        out_shape=jax.ShapeDtypeStruct((M, r), jnp.float32),
        grid=grid,
        in_specs=[
            pl.BlockSpec((TM, H), lambda i: (i, 0)),         # x row-tiles
            pl.BlockSpec((H, d_pad), lambda i: (0, 0)),      # w1_t (VMEM-resident)
            pl.BlockSpec((1, d_pad), lambda i: (0, 0)),      # b1
            pl.BlockSpec((d_pad, r_pad), lambda i: (0, 0)),  # w2_t (VMEM-resident)
            pl.BlockSpec((1, r_pad), lambda i: (0, 0)),      # b2
        ],
        out_specs=pl.BlockSpec((TM, r), lambda i: (i, 0)),
        compiler_params=pltpu.CompilerParams(
            dimension_semantics=("parallel",),
            allow_input_fusion=[True, False, False, False, False],
        ),
        cost_estimate=cost,
    )(x2d, w1_t, b1_p, w2_t, b2_p)

    return out2d.reshape(B, S, r)


if __name__ == "__main__":
    # Module hyperparameters (fixed by Attn2.__init__ for method='general')
    hidden_size = 32
    d_a = 100
    r = 10

    # Small input shapes: batch=2, seq=8, hidden=32
    B, S, H = 2, 8, hidden_size

    key = jax.random.PRNGKey(0)
    k_x, k_w1, k_w2 = jax.random.split(key, 3)

    enc = jax.random.normal(k_x, (B, S, H), dtype=jnp.float32)

    # Deterministic parameter init (biases filled to 0, per the module __init__).
    w1 = jax.random.normal(k_w1, (d_a, H), dtype=jnp.float32) * 0.1   # linear_first.weight
    b1 = jnp.zeros((d_a,), dtype=jnp.float32)                          # linear_first.bias
    w2 = jax.random.normal(k_w2, (r, d_a), dtype=jnp.float32) * 0.1   # linear_second.weight
    b2 = jnp.zeros((r,), dtype=jnp.float32)                            # linear_second.bias

    # One-time param prep (transpose + lane-align padding), hoisted out of the
    # per-call path.
    w1_t, b1_p, w2_t, b2_p, r_out = prepare_params(w1, b1, w2, b2)

    out = attn2_forward(enc, w1_t, b1_p, w2_t, b2_p, r=r_out)
    out = jax.block_until_ready(out)

    # Reference check in plain JAX (same math as the PyTorch forward).
    ref = jnp.tanh(enc @ w1.T + b1) @ w2.T + b2
    assert out.shape == (B, S, r), out.shape
    assert jnp.allclose(out, ref, atol=1e-5, rtol=1e-5)

    print("KERNEL_OK")
</pallas_src>

<mosaic_0001>
module attributes {stable_mosaic.version = 11 : i64} {
  func.func @attn2_kernel(%arg0: i32, %arg1: memref<8x32xf32, #tpu.memory_space<vmem>>, %arg2: memref<32x128xf32, #tpu.memory_space<vmem>>, %arg3: memref<1x128xf32, #tpu.memory_space<vmem>>, %arg4: memref<128x128xf32, #tpu.memory_space<vmem>>, %arg5: memref<1x128xf32, #tpu.memory_space<vmem>>, %arg6: memref<8x10xf32, #tpu.memory_space<vmem>>) attributes {dimension_semantics = [#tpu.dimension_semantics<parallel>], iteration_bounds = array<i64: 2>, scalar_prefetch = 0 : i64, scratch_operands = 0 : i64, tpu.core_type = #tpu.core_type<tc>, window_params = [{transform_indices = @transform_0, window_bounds = array<i64: 8, 32>}, {pipeline_mode = #tpu.pipeline_mode<synchronous>, transform_indices = @transform_1, window_bounds = array<i64: 32, 128>}, {pipeline_mode = #tpu.pipeline_mode<synchronous>, transform_indices = @transform_2, window_bounds = array<i64: 1, 128>}, {pipeline_mode = #tpu.pipeline_mode<synchronous>, transform_indices = @transform_3, window_bounds = array<i64: 128, 128>}, {pipeline_mode = #tpu.pipeline_mode<synchronous>, transform_indices = @transform_4, window_bounds = array<i64: 1, 128>}, {transform_indices = @transform_5, window_bounds = array<i64: 8, 10>}]} {
    %c0 = arith.constant 0 : index
    %c0_0 = arith.constant 0 : index
    %0 = vector.load %arg1[%c0, %c0_0] : memref<8x32xf32, #tpu.memory_space<vmem>>, vector<8x32xf32>
    %c0_1 = arith.constant 0 : index
    %c0_2 = arith.constant 0 : index
    %1 = vector.load %arg2[%c0_1, %c0_2] : memref<32x128xf32, #tpu.memory_space<vmem>>, vector<32x128xf32>
    %cst = arith.constant dense<0.000000e+00> : vector<8x128xf32>
    %2 = tpu.matmul %0, %1, %cst {dimension_numbers = #tpu.dot_dimension_numbers<[1], [0], [0], [1], [0, 0, 1, 1], [], []>} : vector<8x32xf32>, vector<32x128xf32>, vector<8x128xf32> -> vector<8x128xf32>
    %c0_3 = arith.constant 0 : index
    %c0_4 = arith.constant 0 : index
    %3 = vector.load %arg3[%c0_3, %c0_4] : memref<1x128xf32, #tpu.memory_space<vmem>>, vector<1x128xf32>
    %4 = vector.broadcast %3 : vector<1x128xf32> to vector<8x128xf32>
    %5 = arith.addf %2, %4 : vector<8x128xf32>
    %6 = math.tanh %5 : vector<8x128xf32>
    %c0_5 = arith.constant 0 : index
    %c0_6 = arith.constant 0 : index
    %7 = vector.load %arg4[%c0_5, %c0_6] : memref<128x128xf32, #tpu.memory_space<vmem>>, vector<128x128xf32>
    %cst_7 = arith.constant dense<0.000000e+00> : vector<8x128xf32>
    %8 = tpu.matmul %6, %7, %cst_7 {dimension_numbers = #tpu.dot_dimension_numbers<[1], [0], [0], [1], [0, 0, 1, 1], [], []>} : vector<8x128xf32>, vector<128x128xf32>, vector<8x128xf32> -> vector<8x128xf32>
    %c0_8 = arith.constant 0 : index
    %c0_9 = arith.constant 0 : index
    %9 = vector.load %arg5[%c0_8, %c0_9] : memref<1x128xf32, #tpu.memory_space<vmem>>, vector<1x128xf32>
    %10 = vector.broadcast %9 : vector<1x128xf32> to vector<8x128xf32>
    %11 = arith.addf %8, %10 : vector<8x128xf32>
    %12 = vector.extract_strided_slice %11 {offsets = [0, 0], sizes = [8, 10], strides = [1, 1]} : vector<8x128xf32> to vector<8x10xf32>
    %c0_10 = arith.constant 0 : index
    %c0_11 = arith.constant 0 : index
    %13 = vector.load %arg6[%c0_10, %c0_11] : memref<8x10xf32, #tpu.memory_space<vmem>>, vector<8x10xf32>
    tpu.vector_store %arg6[%c0_10, %c0_11], %12 {strides = array<i32>} : memref<8x10xf32, #tpu.memory_space<vmem>>, vector<8x10xf32>,
    return
  }
  func.func @transform_0(%arg0: i32) -> (i32, i32) {
    %c0_i32 = arith.constant 0 : i32
    %c0_i32_0 = arith.constant 0 : i32
    return %arg0, %c0_i32 : i32, i32
  }
  func.func @transform_1(%arg0: i32) -> (i32, i32) {
    %c0_i32 = arith.constant 0 : i32
    %c0_i32_0 = arith.constant 0 : i32
    %c0_i32_1 = arith.constant 0 : i32
    return %c0_i32, %c0_i32_0 : i32, i32
  }
  func.func @transform_2(%arg0: i32) -> (i32, i32) {
    %c0_i32 = arith.constant 0 : i32
    %c0_i32_0 = arith.constant 0 : i32
    %c0_i32_1 = arith.constant 0 : i32
    return %c0_i32, %c0_i32_0 : i32, i32
  }
  func.func @transform_3(%arg0: i32) -> (i32, i32) {
    %c0_i32 = arith.constant 0 : i32
    %c0_i32_0 = arith.constant 0 : i32
    %c0_i32_1 = arith.constant 0 : i32
    return %c0_i32, %c0_i32_0 : i32, i32
  }
  func.func @transform_4(%arg0: i32) -> (i32, i32) {
    %c0_i32 = arith.constant 0 : i32
    %c0_i32_0 = arith.constant 0 : i32
    %c0_i32_1 = arith.constant 0 : i32
    return %c0_i32, %c0_i32_0 : i32, i32
  }
  func.func @transform_5(%arg0: i32) -> (i32, i32) {
    %c0_i32 = arith.constant 0 : i32
    %c0_i32_0 = arith.constant 0 : i32
    return %arg0, %c0_i32 : i32, i32
  }
}

</mosaic_0001>

<llo_original>
// kernel: attn2_forward.2
$region0: #{attn2_forward.2}
  #allocation0 [shape = 'u32[]', space=smem, size = 0x4, offset = 0x4, fixed_abs, tag = 'smem constant byte address 0x4 - core index']
  #allocation1 [shape = 'u32[72,128]{1,0:T(1,128)}', space=vmem, size = 0x9000, scoped, tag = 'internal scratch']
  %s0 = inlined_call_operand.hbm [shape: f32[32,128], index: 0, kind: input, shape index: {}]
  %s1 = inlined_call_operand.vmem [shape: f32[1,128], index: 1, kind: input, shape index: {}]
  %s2 = inlined_call_operand.hbm [shape: f32[128,128], index: 2, kind: input, shape index: {}]
  %s3 = inlined_call_operand.vmem [shape: f32[1,128], index: 3, kind: input, shape index: {}]
  %s4 = inlined_call_operand.vmem [shape: f32[2,8,32], index: 4, kind: input, shape index: {}]
  %s5 = inlined_call_operand.hbm [shape: f32[16,10], index: 5, kind: output, shape index: {}]
  %s6 = sld [smem:[#allocation0]]
  $region61: #{attn2_forward.2} parent=0
    _
  %s8 = ssub.s32 1, %s6
  %s9 = scalar_select 0, %s8, %s6
  $region1: #{attn2_forward.2} parent=0
    #allocation2 [shape = 'u8[16384]{0}', space=vmem, size = 0x4000, scoped, tag = 'input window, operand 1, single buffered']
    #allocation3 [shape = 's32[2]{0}', space=sflag, size = 0x8, scoped, tag = 'scoped memory for attn2_forward.2']
    #allocation4 [shape = 's32[2]{0}', space=sflag, size = 0x8, scoped, tag = 'scoped memory for attn2_forward.2']
    #allocation5 [shape = 'u8[65536]{0}', space=vmem, size = 0x10000, scoped, tag = 'input window, operand 3, single buffered']
    #allocation6 [shape = 's32[1]{0}', space=sflag, size = 0x4, scoped, tag = 'scoped memory for attn2_forward.2']
    #allocation7 [shape = 'u8[8192]{0}', space=vmem, size = 0x2000, scoped, tag = 'output window, operand 0']
    %10 = vsyncpa [#allocation3], 0
    %11 = vsyncpa [#allocation6], 0
    %12 = vsyncpa [#allocation4], 0
    %s13 = scalar_lea.sflag [#allocation4], 1
    %14 = vsyncpa %s13, 0
    loop: start=0, step=1, limit=4
    $region2: #{attn2_forward.2} parent=1 // loop_pre_header
      _
    $region3: #{attn2_forward.2} parent=1 // loop_header
      %s16 = sphi 0, %s20
      %p17 = scmp.ge.s32.totalorder %s16, 4
      %s26 = sphi 0, %s28
      %s29 = sphi 0, %s26
      %s30 = sphi 0, %s29
      %s46 = sphi 0, %s30
      %s50 = sphi 0, %s50
      %s52 = sphi 0, %s50
      %s53 = sphi 0, %s52
      %s67 = sphi 0, %s53
      %s71 = sphi 0, %s71
      %s73 = sphi 0, %s71
      %s74 = sphi 0, %s73
      %s88 = sphi 0, %s74
      %s92 = sphi 0, %s92
      %s94 = sphi 0, %s92
      %s95 = sphi 0, %s94
      %s109 = sphi 0, %s95
      %s113 = sphi 0, %s113
      %s115 = sphi 0, %s113
      %s116 = sphi 0, %s115
      %s130 = sphi 0, %s116
      %s136 = sphi 0, %s138
      %s139 = sphi 0, %s136
      %s140 = sphi 0, %s139
      %s156 = sphi 0, %s140
    $region4: #{attn2_forward.2} parent=1 // loop_header_branch
      %19 = sbr.rel (%p17) target = $region8
    $region5: #{attn2_forward.2} parent=1 // loop_body
      %s21 = ssub.s32 %s16, 1
      %s22 = ssub.s32 %s16, 2
      %s23 = sadd.s32 %s16, 1
      %s24 = ssub.s32 %s16, %s23
      %p25 = scmp.eq.s32.totalorder %s24, 0
      %s27 = sadd.s32 %s26, 1
      %s28 = scalar_select %p25, %s26, %s27
      %p31 = pneg %p25
      %p32 = scmp.eq.s32.totalorder %s16, 1
      %p33 = por %p31, %p32
      %p34 = scmp.ne.s32.totalorder %s26, %s29
      %p35 = scmp.eq.s32.totalorder %s16, 0
      %p36 = por %p34, %p35
      %p37 = scmp.ne.s32.totalorder %s26, %s29
      %p38 = scmp.eq.s32.totalorder %s21, 1
      %p39 = por %p37, %p38
      %p40 = scmp.ne.s32.totalorder %s29, %s30
      %p41 = scmp.eq.s32.totalorder %s21, 0
      %p42 = por %p40, %p41
      %p43 = scmp.ne.s32.totalorder %s29, %s30
      %p44 = scmp.eq.s32.totalorder %s22, 1
      %p45 = por %p43, %p44
      %p47 = scmp.ne.s32.totalorder %s30, %s46
      %p48 = scmp.eq.s32.totalorder %s22, 0
      %p49 = por %p47, %p48
      %s51 = sadd.s32 %s50, 1
      %p54 = scmp.eq.s32.totalorder %s16, 1
      %p55 = scmp.ne.s32.totalorder %s50, %s52
      %p56 = scmp.eq.s32.totalorder %s16, 0
      %p57 = por %p55, %p56
      %p58 = scmp.ne.s32.totalorder %s50, %s52
      %p59 = scmp.eq.s32.totalorder %s21, 1
      %p60 = por %p58, %p59
      %p61 = scmp.ne.s32.totalorder %s52, %s53
      %p62 = scmp.eq.s32.totalorder %s21, 0
      %p63 = por %p61, %p62
      %p64 = scmp.ne.s32.totalorder %s52, %s53
      %p65 = scmp.eq.s32.totalorder %s22, 1
      %p66 = por %p64, %p65
      %p68 = scmp.ne.s32.totalorder %s53, %s67
      %p69 = scmp.eq.s32.totalorder %s22, 0
      %p70 = por %p68, %p69
      %s72 = sadd.s32 %s71, 1
      %p75 = scmp.eq.s32.totalorder %s16, 1
      %p76 = scmp.ne.s32.totalorder %s71, %s73
      %p77 = scmp.eq.s32.totalorder %s16, 0
      %p78 = por %p76, %p77
      %p79 = scmp.ne.s32.totalorder %s71, %s73
      %p80 = scmp.eq.s32.totalorder %s21, 1
      %p81 = por %p79, %p80
      %p82 = scmp.ne.s32.totalorder %s73, %s74
      %p83 = scmp.eq.s32.totalorder %s21, 0
      %p84 = por %p82, %p83
      %p85 = scmp.ne.s32.totalorder %s73, %s74
      %p86 = scmp.eq.s32.totalorder %s22, 1
      %p87 = por %p85, %p86
      %p89 = scmp.ne.s32.totalorder %s74, %s88
      %p90 = scmp.eq.s32.totalorder %s22, 0
      %p91 = por %p89, %p90
      %s93 = sadd.s32 %s92, 1
      %p96 = scmp.eq.s32.totalorder %s16, 1
      %p97 = scmp.ne.s32.totalorder %s92, %s94
      %p98 = scmp.eq.s32.totalorder %s16, 0
      %p99 = por %p97, %p98
      %p100 = scmp.ne.s32.totalorder %s92, %s94
      %p101 = scmp.eq.s32.totalorder %s21, 1
      %p102 = por %p100, %p101
      %p103 = scmp.ne.s32.totalorder %s94, %s95
      %p104 = scmp.eq.s32.totalorder %s21, 0
      %p105 = por %p103, %p104
      %p106 = scmp.ne.s32.totalorder %s94, %s95
      %p107 = scmp.eq.s32.totalorder %s22, 1
      %p108 = por %p106, %p107
      %p110 = scmp.ne.s32.totalorder %s95, %s109
      %p111 = scmp.eq.s32.totalorder %s22, 0
      %p112 = por %p110, %p111
      %s114 = sadd.s32 %s113, 1
      %p117 = scmp.eq.s32.totalorder %s16, 1
      %p118 = scmp.ne.s32.totalorder %s113, %s115
      %p119 = scmp.eq.s32.totalorder %s16, 0
      %p120 = por %p118, %p119
      %p121 = scmp.ne.s32.totalorder %s113, %s115
      %p122 = scmp.eq.s32.totalorder %s21, 1
      %p123 = por %p121, %p122
      %p124 = scmp.ne.s32.totalorder %s115, %s116
      %p125 = scmp.eq.s32.totalorder %s21, 0
      %p126 = por %p124, %p125
      %p127 = scmp.ne.s32.totalorder %s115, %s116
      %p128 = scmp.eq.s32.totalorder %s22, 1
      %p129 = por %p127, %p128
      %p131 = scmp.ne.s32.totalorder %s116, %s130
      %p132 = scmp.eq.s32.totalorder %s22, 0
      %p133 = por %p131, %p132
      %s134 = ssub.s32 %s16, %s23
      %p135 = scmp.eq.s32.totalorder %s134, 0
      %s137 = sadd.s32 %s136, 1
      %s138 = scalar_select %p135, %s136, %s137
      %p141 = pneg %p135
      %p142 = scmp.eq.s32.totalorder %s16, 1
      %p143 = por %p141, %p142
      %p144 = scmp.ne.s32.totalorder %s136, %s139
      %p145 = scmp.eq.s32.totalorder %s16, 0
      %p146 = por %p144, %p145
      %p147 = scmp.ne.s32.totalorder %s136, %s139
      %p148 = scmp.eq.s32.totalorder %s21, 1
      %p149 = por %p147, %p148
      %p150 = scmp.ne.s32.totalorder %s139, %s140
      %p151 = scmp.eq.s32.totalorder %s21, 0
      %p152 = por %p150, %p151
      %p153 = scmp.ne.s32.totalorder %s139, %s140
      %p154 = scmp.eq.s32.totalorder %s22, 1
      %p155 = por %p153, %p154
      %p157 = scmp.ne.s32.totalorder %s140, %s156
      %p158 = scmp.eq.s32.totalorder %s22, 0
      %p159 = por %p157, %p158
      %p160 = scmp.le.s32.totalorder 1, %s16
      %p161 = scmp.lt.s32.totalorder %s16, 3
      %p162 = pnand %p160, %p161
      %p163 = pneg %p162
      // Predicated region
      $region9: #{attn2_forward.2} parent=5 // pred_check
        _
      $region10: #{attn2_forward.2} parent=5 // pred_check_branch
        %165 = sbr.rel (%p162) target = $region12
      $region11: #{attn2_forward.2} parent=5 // pred_region
        %s166 = ssub.s32 %s16, 1
        // Predicated region
        $region13: #{attn2_forward.2} parent=11 // pred_check
          %p167 = pneg %p63
        $region14: #{attn2_forward.2} parent=11 // pred_check_branch
          %169 = sbr.rel (%p167) target = $region16
        $region15: #{attn2_forward.2} parent=11 // pred_region
          %171 = vsyncadd [#allocation3], 0
          %s172 = sshll.u32 %s0, 4
          %s173 = int_to_ptr.hbm [resolvable:$true] %s172
          %s174 = sshll.u32 [#allocation2], 4
          %s175 = int_to_ptr.vmem [resolvable:$true] %s174
          %180 = dma.hbm_to_vmem [thread:$0]  %s173, 512, %s175, [#allocation3], 128, 128, 8
        $region16: #{attn2_forward.2} parent=11 // pred_fallthru
          _
        // Predicated region
        $region17: #{attn2_forward.2} parent=11 // pred_check
          %p181 = pneg %p84
        $region18: #{attn2_forward.2} parent=11 // pred_check_branch
          %183 = sbr.rel (%p181) target = $region20
        $region19: #{attn2_forward.2} parent=11 // pred_region
          _
        $region20: #{attn2_forward.2} parent=11 // pred_fallthru
          _
        // Predicated region
        $region21: #{attn2_forward.2} parent=11 // pred_check
          %p184 = pneg %p105
        $region22: #{attn2_forward.2} parent=11 // pred_check_branch
          %186 = sbr.rel (%p184) target = $region24
        $region23: #{attn2_forward.2} parent=11 // pred_region
          %188 = vsyncadd [#allocation6], 0
          %s189 = sshll.u32 %s2, 4
          %s190 = int_to_ptr.hbm [resolvable:$true] %s189
          %s191 = sshll.u32 [#allocation5], 4
          %s192 = int_to_ptr.vmem [resolvable:$true] %s191
          %197 = dma.hbm_to_vmem [thread:$0]  %s190, 2048, %s192, [#allocation6], 128, 128, 8
        $region24: #{attn2_forward.2} parent=11 // pred_fallthru
          _
        // Predicated region
        $region25: #{attn2_forward.2} parent=11 // pred_check
          %p198 = pneg %p126
        $region26: #{attn2_forward.2} parent=11 // pred_check_branch
          %200 = sbr.rel (%p198) target = $region28
        $region27: #{attn2_forward.2} parent=11 // pred_region
          _
        $region28: #{attn2_forward.2} parent=11 // pred_fallthru
          _
      $region12: #{attn2_forward.2} parent=5 // pred_fallthru
        _
      %p201 = scmp.lt.s32.totalorder %s16, 2
      // Predicated region
      $region29: #{attn2_forward.2} parent=5 // pred_check
        %p202 = pneg %p201
      $region30: #{attn2_forward.2} parent=5 // pred_check_branch
        %204 = sbr.rel (%p202) target = $region32
      $region31: #{attn2_forward.2} parent=5 // pred_region
        // Predicated region
        $region33: #{attn2_forward.2} parent=31 // pred_check
          %p205 = pneg %p36
        $region34: #{attn2_forward.2} parent=31 // pred_check_branch
          %207 = sbr.rel (%p205) target = $region36
        $region35: #{attn2_forward.2} parent=31 // pred_region
          %p208 = scmp.lt.s32.totalorder %s16, 1
          %s209 = scalar_select %p208, %s16, 1
          %s210 = smul.addr %s209, 8
          %s211 = scalar_lea.vmem %s4, %s210
        $region36: #{attn2_forward.2} parent=31 // pred_fallthru
          _
      $region32: #{attn2_forward.2} parent=5 // pred_fallthru
        _
      %p212 = scmp.le.s32.totalorder 1, %s16
      %p213 = scmp.lt.s32.totalorder %s16, 3
      %p214 = pnand %p212, %p213
      %p215 = pneg %p214
      // Predicated region
      $region37: #{attn2_forward.2} parent=5 // pred_check
        _
      $region38: #{attn2_forward.2} parent=5 // pred_check_branch
        %217 = sbr.rel (%p214) target = $region40
      $region39: #{attn2_forward.2} parent=5 // pred_region
        #allocation8 [shape = 'u8[4096]{0}', space=vmem, size = 0x1000, dematerialized = true, scoped, tag = 'FusionAdapter Buffer %fusion.1 = f32[16,32]{1,0:T(8,128)} fusion(%param_4.1), kind=kLoop, calls=%fused_computation.1.clone, metadata={op_name="jit(attn2_forward)/reshape" stack_frame_id=7}']
        %s218 = ssub.s32 %s16, 1
        // Predicated region
        $region41: #{attn2_forward.2} parent=39 // pred_check
          %p219 = pneg %p63
        $region42: #{attn2_forward.2} parent=39 // pred_check_branch
          %221 = sbr.rel (%p219) target = $region44
        $region43: #{attn2_forward.2} parent=39 // pred_region
          %223 = dma.done [#allocation3], 512
        $region44: #{attn2_forward.2} parent=39 // pred_fallthru
          _
        // Predicated region
        $region45: #{attn2_forward.2} parent=39 // pred_check
          %p224 = pneg %p105
        $region46: #{attn2_forward.2} parent=39 // pred_check_branch
          %226 = sbr.rel (%p224) target = $region48
        $region47: #{attn2_forward.2} parent=39 // pred_region
          %228 = dma.done [#allocation6], 2048
        $region48: #{attn2_forward.2} parent=39 // pred_fallthru
          _
        %p229 = scmp.lt.s32.totalorder %s21, 1
        %s230 = scalar_select %p229, %s21, 1
        %s231 = smul.addr %s230, 8
        %s232 = scalar_lea.vmem %s4, %s231
        %p233 = pneg %p42
        %p234 = pneg %p39
        %p235 = pneg %p63
        %p236 = pneg %p60
        %p237 = pneg %p84
        %p238 = pneg %p81
        %p239 = pneg %p105
        %p240 = pneg %p102
        %p241 = pneg %p126
        %p242 = pneg %p123
        %p243 = pneg %p152
        %p244 = pneg %p149
        %s245 = sand.u32 %s139, 1
        %s246 = scalar_lea.sflag [#allocation4], %s245
        %s247 = sand.u32 %s139, 1
        %s248 = smul.addr %s247, 8
        %s249 = scalar_lea.vmem [#allocation7], %s248
        %p250 = scmp.lt.s32.totalorder %s21, 1
        %s251 = scalar_select %p250, %s21, 1
        %s252 = smul.addr %s251, 8
        %s253 = scalar_lea.vmem %s4, %s252
        %v254 = vld [vmem:[%s253] sm:$0xff]
        %s256 = ssub.s32 256, 1
        %257 = vst [vmem:[#allocation8] sm:%s256] %v254
        %v258 = vld [vmem:[#allocation8] sm:$0xff]
        %v259 = vld [vmem:[#allocation2] sm:$0xff]
        %v260 = vld [vmem:[#allocation2 + $0x8] sm:$0xff]
        %v261 = vld [vmem:[#allocation2 + $0x10] sm:$0xff]
        %v262 = vld [vmem:[#allocation2 + $0x18] sm:$0xff]
        %v263 = vld [vmem:[%s1] sm:$0x1]
        %v265 = vperm.slane %v263, 0
        %vm267 = vcmask 261120
        %v269 = vsel %vm267, %v258, 0
        %271 = vmatpush.msra.mxu0 0.0
        %272 = vmatpush.msra.mxu0 0.0
        %273 = vmatpush.msra.mxu0 0.0
        %274 = vmatpush.msra.mxu0 0.0
        %275 = vmatpush.msra.mxu0 0.0
        %276 = vmatpush.msra.mxu0 0.0
        %277 = vmatpush.msra.mxu0 0.0
        %278 = vmatpush.msra.mxu0 0.0
        %279 = vmatpush.msra.mxu0 0.0
        %280 = vmatpush.msra.mxu0 0.0
        %281 = vmatpush.msra.mxu0 0.0
        %282 = vmatpush.msra.mxu0 0.0
        %283 = vmatpush.msra.mxu0 %v262
        %284 = vmatpush.msra.mxu0 %v261
        %285 = vmatpush.msra.mxu0 %v260
        %286 = vmatpush.msra.mxu0 %v259
        %287 = vmatmul.f32.gmra.mxu0 %v269
        %v288 = vpop.f32.mrf.mxu0
        %v289 = vadd.f32 %v265, %v288
        %290 = vdwg.mxu0
        %v291 = vtanh.pop %v289
        %v292 = vld [vmem:[#allocation5] sm:$0xff]
        %v293 = vld [vmem:[#allocation5 + $0x8] sm:$0xff]
        %v294 = vld [vmem:[#allocation5 + $0x10] sm:$0xff]
        %v295 = vld [vmem:[#allocation5 + $0x18] sm:$0xff]
        %v296 = vld [vmem:[#allocation5 + $0x20] sm:$0xff]
        %v297 = vld [vmem:[#allocation5 + $0x28] sm:$0xff]
        %v298 = vld [vmem:[#allocation5 + $0x30] sm:$0xff]
        %v299 = vld [vmem:[#allocation5 + $0x38] sm:$0xff]
        %v300 = vld [vmem:[#allocation5 + $0x40] sm:$0xff]
        %v301 = vld [vmem:[#allocation5 + $0x48] sm:$0xff]
        %v302 = vld [vmem:[#allocation5 + $0x50] sm:$0xff]
        %v303 = vld [vmem:[#allocation5 + $0x58] sm:$0xff]
        %v304 = vld [vmem:[#allocation5 + $0x60] sm:$0xff]
        %v305 = vld [vmem:[#allocation5 + $0x68] sm:$0xff]
        %v306 = vld [vmem:[#allocation5 + $0x70] sm:$0xff]
        %v307 = vld [vmem:[#allocation5 + $0x78] sm:$0xff]
        %v308 = vld [vmem:[%s3] sm:$0x1]
        %v310 = vperm.slane %v308, 0
        %312 = vmatpush.msra.mxu0 %v307
        %313 = vmatpush.msra.mxu0 %v306
        %314 = vmatpush.msra.mxu0 %v305
        %315 = vmatpush.msra.mxu0 %v304
        %316 = vmatpush.msra.mxu0 %v303
        %317 = vmatpush.msra.mxu0 %v302
        %318 = vmatpush.msra.mxu0 %v301
        %319 = vmatpush.msra.mxu0 %v300
        %320 = vmatpush.msra.mxu0 %v299
        %321 = vmatpush.msra.mxu0 %v298
        %322 = vmatpush.msra.mxu0 %v297
        %323 = vmatpush.msra.mxu0 %v296
        %324 = vmatpush.msra.mxu0 %v295
        %325 = vmatpush.msra.mxu0 %v294
        %326 = vmatpush.msra.mxu0 %v293
        %327 = vmatpush.msra.mxu0 %v292
        %328 = vmatmul.f32.gmra.mxu0 %v291
        %v329 = vpop.f32.mrf.mxu0
        %v330 = vadd.f32 %v310, %v329
        %331 = vdwg.mxu0
        %vm332 = vcmask 80896
        %333 = vst.msk [vmem:[%s249] sm:$0xff] %vm332, %v330
        %s334 = sand.u32 %s139, 1
        %s335 = scalar_lea.sflag [#allocation4], %s334
        %s336 = sand.u32 %s139, 1
        %s337 = smul.addr %s336, 8
        %s338 = scalar_lea.vmem [#allocation7], %s337
        // Predicated region
        $region49: #{attn2_forward.2} parent=39 // pred_check
          %p339 = pneg %p149
        $region50: #{attn2_forward.2} parent=39 // pred_check_branch
          %341 = sbr.rel (%p339) target = $region52
        $region51: #{attn2_forward.2} parent=39 // pred_region
          %343 = vsyncadd %s335, 0
          %s344 = smul.addr %s21, 8
          %s345 = scalar_lea.hbm %s5, %s344
          %s347 = sshll.u32 %s338, 4
          %s348 = int_to_ptr.vmem [resolvable:$true] %s347
          %s349 = sshll.u32 %s345, 4
          %s350 = int_to_ptr.hbm [resolvable:$true] %s349
          %352 = dma.vmem_to_hbm [thread:$0]  %s348, 128, %s350, %s335
        $region52: #{attn2_forward.2} parent=39 // pred_fallthru
          _
      $region40: #{attn2_forward.2} parent=5 // pred_fallthru
        _
      %p353 = scmp.le.s32.totalorder 2, %s16
      // Predicated region
      $region53: #{attn2_forward.2} parent=5 // pred_check
        %p354 = pneg %p353
      $region54: #{attn2_forward.2} parent=5 // pred_check_branch
        %356 = sbr.rel (%p354) target = $region56
      $region55: #{attn2_forward.2} parent=5 // pred_region
        %s357 = ssub.s32 %s16, 2
        // Predicated region
        $region57: #{attn2_forward.2} parent=55 // pred_check
          %p358 = pneg %p155
        $region58: #{attn2_forward.2} parent=55 // pred_check_branch
          %360 = sbr.rel (%p358) target = $region60
        $region59: #{attn2_forward.2} parent=55 // pred_region
          %s361 = sand.u32 %s140, 1
          %s362 = scalar_lea.sflag [#allocation4], %s361
          %s363 = sand.u32 %s140, 1
          %s364 = smul.addr %s363, 8
          %s365 = scalar_lea.vmem [#allocation7], %s364
          %367 = dma.done %s362, 128
        $region60: #{attn2_forward.2} parent=55 // pred_fallthru
          _
      $region56: #{attn2_forward.2} parent=5 // pred_fallthru
        _
    $region6: #{attn2_forward.2} parent=1 // loop_footer
      %s20 = sadd.s32 1, %s16
    $region7: #{attn2_forward.2} parent=1 // loop_footer_branch
      %15 = sbr.rel target = $region3
    $region8: #{attn2_forward.2} parent=1 // loop_exit
      _
    %368 = vsyncpa [#allocation3], 1
    %s369 = scalar_lea.sflag [#allocation3], 1
    %370 = vsyncpa %s369, 1
    %371 = vsyncpa [#allocation6], 1
    %372 = vsyncpa [#allocation4], 1
    %s373 = scalar_lea.sflag [#allocation4], 1
    %374 = vsyncpa %s373, 1

</llo_original>
